<compile_context>
chip_gen: v7x
topology: tpu7x:2x2x1
jax: 0.10.0
libtpu: 0.0.40
codegen_flags: <defaults>
</compile_context>

<pallas_src>
import functools

import jax
import jax.numpy as jnp
from jax import lax
from jax.experimental import pallas as pl
from jax.experimental.pallas import tpu as pltpu


def _round_up(x, m):
    return ((x + m - 1) // m) * m


def _tpu_tiling_params():
    """(preferred channel tile, VMEM budget in bytes) — safe defaults off-TPU / interpret."""
    ct_pref, cap = 128, 64 << 20
    try:
        dev = jax.devices()[0]
        if dev.platform == "tpu":
            kind = dev.device_kind.lower()
            if ("v6" in kind) or ("v7" in kind):
                ct_pref = 256                          # 2x256x256 MXU
            try:
                cap = int(pltpu.get_tpu_info().vmem_capacity_bytes * 0.85)
            except Exception:
                cap = (100 << 20) if ("v5" in kind or "v6" in kind) else (48 << 20)
    except Exception:
        pass
    return ct_pref, cap


def _gen_block_kernel(seed_ref, x_ref, w_ref, gamma_ref, beta_ref, out_ref, acc_ref, *,
                      group_taps, p, rows, chunk, eps, use_relu, negative_slope,
                      apply_dropout):
    """One (sample, C_out-tile) step: chained tap matmuls -> InstanceNorm -> act (-> dropout)."""
    ct = out_ref.shape[-1]

    # ---- Phase 1: convolution.  Per group: chained dots over contiguous row slabs,
    #      raw f32 result streamed into the VMEM scratch, stats accumulated on the fly. ----
    s_sum = jnp.zeros((1, ct), jnp.float32)
    s_sq = jnp.zeros((1, ct), jnp.float32)
    for g, taps in enumerate(group_taps):
        for r0 in range(0, p, chunk):
            rsz = min(chunk, p - r0)
            acc = None
            for (cx, roff, t) in taps:
                if cx is None:                                   # down mode: 3-D packed input
                    slab = x_ref[0, roff + r0:roff + r0 + rsz, :]
                else:                                            # up mode: pre-shifted windows
                    slab = x_ref[0, cx, roff + r0:roff + r0 + rsz, :]
                contrib = jnp.dot(slab, w_ref[t], preferred_element_type=jnp.float32)
                acc = contrib if acc is None else acc + contrib
            s_sum = s_sum + jnp.sum(acc, axis=0, keepdims=True)
            s_sq = s_sq + jnp.sum(acc * acc, axis=0, keepdims=True)
            acc_ref[g * p + r0:g * p + r0 + rsz, :] = acc

    # ---- Phase 2: InstanceNorm stats (one pass: var = E[x^2] - mean^2, f32). ----
    inv_n = 1.0 / float(rows)
    mean = s_sum * inv_n
    var = jnp.maximum(s_sq * inv_n - mean * mean, 0.0)
    scale = lax.rsqrt(var + eps) * gamma_ref[...]                # (1, ct) per-channel consts
    shift = beta_ref[...] - mean * scale

    if apply_dropout:
        key = (seed_ref[0].astype(jnp.uint32) * jnp.uint32(0x9E3779B9)
               + pl.program_id(0).astype(jnp.uint32) * jnp.uint32(0x85EBCA6B)
               + pl.program_id(1).astype(jnp.uint32) * jnp.uint32(0xC2B2AE35))

    # ---- Phase 3: fused normalize + activation (+ dropout) + cast, streamed over slabs. ----
    for r0 in range(0, rows, chunk):
        rsz = min(chunk, rows - r0)
        y = acc_ref[r0:r0 + rsz, :] * scale + shift
        if use_relu:
            y = jnp.maximum(y, 0.0)
        else:
            y = jnp.where(y > 0, y, negative_slope * y)
        if apply_dropout:
            # Counter-based hash (portable replacement for the TPU stateful PRNG).
            rid = lax.broadcasted_iota(jnp.int32, (rsz, ct), 0).astype(jnp.uint32) + jnp.uint32(r0)
            cid = lax.broadcasted_iota(jnp.int32, (rsz, ct), 1).astype(jnp.uint32)
            h = (rid * jnp.uint32(0x27D4EB2F)) ^ (cid * jnp.uint32(0x165667B1)) ^ key
            h = h ^ (h >> 15)
            h = h * jnp.uint32(0x2C1B3C6D)
            h = h ^ (h >> 12)
            h = h * jnp.uint32(0x297A2D39)
            h = h ^ (h >> 15)
            keep = (h & jnp.uint32(1)) == 0
            y = jnp.where(keep, y * 2.0, 0.0)
        out_ref[0, r0:r0 + rsz, :] = y.astype(out_ref.dtype)


def generator_cnn_block(x, weight, gamma, beta, *, down=True, activation="relu",
                        use_dropout=True, training=False, dropout_seed=0,
                        eps=1e-5, compute_dtype=jnp.bfloat16, row_chunk=2048):
    """x: (N, C_in, H, W) NCHW.
    down=True : weight (C_out, C_in, 4, 4)   (Conv2d, reflect pad 1, stride 2)
    down=False: weight (C_in, C_out, 4, 4)   (ConvTranspose2d, stride 2, pad 1)
    gamma/beta: (C_out,) InstanceNorm affine parameters.
    Returns NCHW output in `compute_dtype` (bf16)."""
    n, c_in, h, w = x.shape
    assert h % 2 == 0 and w % 2 == 0, "spatial dims must be even (stride-2 block)"
    cdt = compute_dtype
    xc = x.astype(cdt)

    taps, gtaps = [], []
    if down:
        c_out = weight.shape[0]
        assert weight.shape == (c_out, c_in, 4, 4)
        oh, ow = h // 2, w // 2
        p = oh * ow
        num_groups = 1
        k_dim = 8 * c_in
        # reflect pad -> NHWC -> H space-to-depth + W partial-im2col -> (N, (OH+1)*OW, 8*C_in)
        xpad = jnp.pad(xc, ((0, 0), (0, 0), (1, 1), (1, 1)), mode="reflect")
        xpad = xpad.transpose(0, 2, 3, 1)                                   # (N, H+2, W+2, C)
        cols = [xpad[:, :, kw:kw + 2 * ow - 1:2, :] for kw in range(4)]     # 4 x (N, H+2, OW, C)
        xp = jnp.stack(cols, axis=3)                                        # (N, H+2, OW, 4, C)
        xp = xp.reshape(n, oh + 1, 2, ow, 4, c_in)
        xp = xp.transpose(0, 1, 3, 2, 4, 5).reshape(n, (oh + 1) * ow, k_dim)
        wc = weight.astype(cdt)
        glist = []
        for hb in range(2):                                                 # 2 vertical taps
            wt = wc[:, :, 2 * hb:2 * hb + 2, :]                             # (co, ci, s, kw)
            wt = wt.transpose(2, 3, 1, 0).reshape(k_dim, c_out)             # rows = (s, kw, ci)
            taps.append(wt)
            glist.append((None, hb * ow, hb))                               # (cx, row_off, tap)
        gtaps.append(tuple(glist))
        in_x_spec = pl.BlockSpec((1, (oh + 1) * ow, k_dim), lambda i, j, s: (i, 0, 0))
    else:
        c_out = weight.shape[1]
        assert weight.shape == (c_in, c_out, 4, 4)
        oh, ow = h, w                       # per-parity-class spatial size (full output 2H x 2W)
        p = oh * ow
        num_groups = 4
        k_dim = c_in
        # zero pad -> NHWC -> 3 pre-shifted column windows -> (N, 3, (H+2)*W, C_in)
        xzp = jnp.pad(xc, ((0, 0), (0, 0), (1, 1), (1, 1)))
        xzp = xzp.transpose(0, 2, 3, 1)                                     # (N, H+2, W+2, C)
        shifts = [xzp[:, :, cx:cx + w, :] for cx in range(3)]
        xp = jnp.stack(shifts, axis=1).reshape(n, 3, (h + 2) * w, c_in)
        wc = weight.astype(cdt)
        t = 0
        for ry in range(2):                                                 # output parity class
            for rx in range(2):
                glist = []
                for dy in range(2):
                    for dx in range(2):
                        kh = 3 - ry - 2 * dy
                        kw = 3 - rx - 2 * dx
                        taps.append(wc[:, :, kh, kw])                       # (c_in, c_out)
                        glist.append((rx + dx, (ry + dy) * w, t))
                        t += 1
                gtaps.append(tuple(glist))
        in_x_spec = pl.BlockSpec((1, 3, (h + 2) * w, k_dim), lambda i, j, s: (i, 0, 0, 0))

    rows = num_groups * p
    num_taps = len(taps)
    chunk = min(row_chunk, p)

    # --- Channel-tile and VMEM sizing (generation-aware, falls back safely off-TPU). ---
    ct_pref, vmem_cap = _tpu_tiling_params()
    ct = min(ct_pref, _round_up(c_out, 128))

    def _estimate(ct_):
        in_bytes = (xp.size // n) * 2                    # packed input block, bf16
        w_bytes = num_taps * k_dim * ct_ * 2
        out_bytes = rows * ct_ * 2
        scr_bytes = rows * ct_ * 4                       # raw-conv f32 scratch
        tmp_bytes = 6 * min(chunk, rows) * ct_ * 4       # bounded per-chunk temporaries
        est_ = (2 * in_bytes + 2 * out_bytes + 2 * w_bytes + scr_bytes + tmp_bytes + (2 << 20))
        return est_, _round_up(c_out, ct_)

    est, cp = _estimate(ct)
    if est > vmem_cap and ct > 128:
        ct = 128
        est, cp = _estimate(ct)
    # NOTE: if est still exceeds vmem_cap the shapes need the spatially-tiled path (TODO above).
    vmem_limit = int(min(max(est, 16 << 20), vmem_cap))

    w_taps = jnp.stack(taps, axis=0)                                        # (T, K, C_out)
    w_taps = jnp.pad(w_taps, ((0, 0), (0, 0), (0, cp - c_out)))
    gamma_p = jnp.pad(gamma.astype(jnp.float32), (0, cp - c_out)).reshape(1, cp)
    beta_p = jnp.pad(beta.astype(jnp.float32), (0, cp - c_out)).reshape(1, cp)
    seed = jnp.array([dropout_seed], dtype=jnp.int32)

    kernel = functools.partial(
        _gen_block_kernel,
        group_taps=tuple(gtaps), p=p, rows=rows, chunk=chunk, eps=eps,
        use_relu=(activation == "relu"), negative_slope=0.2,
        apply_dropout=bool(use_dropout and training))

    out = pl.pallas_call(
        kernel,
        out_shape=jax.ShapeDtypeStruct((n, rows, cp), cdt),
        grid_spec=pltpu.PrefetchScalarGridSpec(
            num_scalar_prefetch=1,                                   # dropout seed in SMEM
            grid=(n, cp // ct),
            in_specs=[
                in_x_spec,
                pl.BlockSpec((num_taps, k_dim, ct), lambda i, j, s: (0, 0, j)),
                pl.BlockSpec((1, ct), lambda i, j, s: (0, j)),
                pl.BlockSpec((1, ct), lambda i, j, s: (0, j)),
            ],
            out_specs=pl.BlockSpec((1, rows, ct), lambda i, j, s: (i, 0, j)),
            scratch_shapes=[pltpu.VMEM((rows, ct), jnp.float32)],
        ),
        compiler_params=pltpu.CompilerParams(
            # TODO(synk): pltpu.CORE_PARALLEL on the channel-tile axis for v7x (2 TCs/chip).
            dimension_semantics=("parallel", "parallel"),
            vmem_limit_bytes=vmem_limit),
    )(seed, xp, w_taps, gamma_p, beta_p)

    if down:
        out = out.reshape(n, oh, ow, cp)[..., :c_out].transpose(0, 3, 1, 2)          # NCHW
    else:
        # rows are (parity class ry,rx | oy,ox); single fused depth-to-space + NCHW transpose.
        out = out.reshape(n, 2, 2, oh, ow, cp)[..., :c_out]
        out = out.transpose(0, 5, 3, 1, 4, 2).reshape(n, c_out, 2 * oh, 2 * ow)
    return out


def _reference(x, weight, gamma, beta, *, down, activation, eps=1e-5):
    """Pure-JAX f32 reference of the PyTorch block (eval mode, no dropout)."""
    xf = x.astype(jnp.float32)
    wf = weight.astype(jnp.float32)
    if down:
        xp = jnp.pad(xf, ((0, 0), (0, 0), (1, 1), (1, 1)), mode="reflect")
        y = lax.conv_general_dilated(xp, wf, (2, 2), "VALID",
                                     dimension_numbers=("NCHW", "OIHW", "NCHW"))
    else:
        w_conv = jnp.flip(wf, axis=(2, 3)).transpose(1, 0, 2, 3)       # (C_out, C_in, 4, 4)
        y = lax.conv_general_dilated(xf, w_conv, (1, 1), ((2, 2), (2, 2)),
                                     lhs_dilation=(2, 2),
                                     dimension_numbers=("NCHW", "OIHW", "NCHW"))
    mean = y.mean(axis=(2, 3), keepdims=True)
    var = ((y - mean) ** 2).mean(axis=(2, 3), keepdims=True)
    y = (y - mean) / jnp.sqrt(var + eps)
    y = y * gamma.reshape(1, -1, 1, 1) + beta.reshape(1, -1, 1, 1)
    if activation == "relu":
        return jnp.maximum(y, 0.0)
    return jnp.where(y > 0, y, 0.2 * y)


if __name__ == "__main__":
    key = jax.random.PRNGKey(0)
    k_x, k_wd, k_wu, k_g, k_b = jax.random.split(key, 5)

    N, C_IN, C_OUT, H, W = 2, 4, 8, 16, 16

    x = jax.random.normal(k_x, (N, C_IN, H, W), dtype=jnp.float32)
    w_down = jax.random.normal(k_wd, (C_OUT, C_IN, 4, 4), dtype=jnp.float32) * 0.1
    w_up = jax.random.normal(k_wu, (C_IN, C_OUT, 4, 4), dtype=jnp.float32) * 0.1
    gamma = 1.0 + 0.1 * jax.random.normal(k_g, (C_OUT,), dtype=jnp.float32)
    beta = 0.1 * jax.random.normal(k_b, (C_OUT,), dtype=jnp.float32)

    # bf16-rounded copies so the f32 reference sees exactly what the bf16 MXU sees.
    xb = x.astype(jnp.bfloat16).astype(jnp.float32)
    wdb = w_down.astype(jnp.bfloat16).astype(jnp.float32)
    wub = w_up.astype(jnp.bfloat16).astype(jnp.float32)

    # ---- down mode: Conv2d(reflect) + InstanceNorm + ReLU (eval: dropout = identity) ----
    out_down = generator_cnn_block(x, w_down, gamma, beta, down=True, activation="relu",
                                   use_dropout=True, training=False)
    out_down = jax.block_until_ready(out_down)
    ref_down = _reference(xb, wdb, gamma, beta, down=True, activation="relu")
    assert out_down.shape == ref_down.shape == (N, C_OUT, H // 2, W // 2)
    err = jnp.max(jnp.abs(out_down.astype(jnp.float32) - ref_down))
    assert err < 2e-2, float(err)

    # ---- up mode: ConvTranspose2d + InstanceNorm + LeakyReLU(0.2) ----
    out_up = generator_cnn_block(x, w_up, gamma, beta, down=False, activation="leaky",
                                 use_dropout=False, training=False)
    out_up = jax.block_until_ready(out_up)
    ref_up = _reference(xb, wub, gamma, beta, down=False, activation="leaky")
    assert out_up.shape == ref_up.shape == (N, C_OUT, 2 * H, 2 * W)
    err = jnp.max(jnp.abs(out_up.astype(jnp.float32) - ref_up))
    assert err < 2e-2, float(err)

    # ---- dropout (training): survivors must equal 2x the eval output, the rest are zero ----
    out_tr = generator_cnn_block(x, w_down, gamma, beta, down=True, activation="relu",
                                 use_dropout=True, training=True, dropout_seed=42)
    out_tr = jax.block_until_ready(out_tr).astype(jnp.float32)
    kept = out_tr != 0.0
    err = jnp.max(jnp.abs(jnp.where(kept, out_tr - 2.0 * out_down.astype(jnp.float32), 0.0)))
    assert err < 2e-2, float(err)

    print("KERNEL_OK")
</pallas_src>

<mosaic_0001>
module attributes {stable_mosaic.version = 11 : i64} {
  func.func @_gen_block_kernel(%arg0: i32, %arg1: i32, %arg2: memref<1xi32, #tpu.memory_space<smem>>, %arg3: memref<1x72x32xbf16, #tpu.memory_space<vmem>>, %arg4: memref<2x32x128xbf16, #tpu.memory_space<vmem>>, %arg5: memref<1x128xf32, #tpu.memory_space<vmem>>, %arg6: memref<1x128xf32, #tpu.memory_space<vmem>>, %arg7: memref<1x64x128xbf16, #tpu.memory_space<vmem>>, %arg8: memref<64x128xf32, #tpu.memory_space<vmem>>) attributes {dimension_semantics = [#tpu.dimension_semantics<parallel>, #tpu.dimension_semantics<parallel>], iteration_bounds = array<i64: 2, 1>, scalar_prefetch = 1 : i64, scratch_operands = 1 : i64, tpu.core_type = #tpu.core_type<tc>, window_params = [{transform_indices = @transform_0, window_bounds = array<i64: 1, 72, 32>}, {transform_indices = @transform_1, window_bounds = array<i64: 2, 32, 128>}, {transform_indices = @transform_2, window_bounds = array<i64: 1, 128>}, {transform_indices = @transform_3, window_bounds = array<i64: 1, 128>}, {transform_indices = @transform_4, window_bounds = array<i64: 1, 64, 128>}]} {
    %cst = arith.constant 0.000000e+00 : f32
    %0 = vector.broadcast %cst : f32 to vector<1x128xf32>
    %cst_0 = arith.constant 0.000000e+00 : f32
    %1 = vector.broadcast %cst_0 : f32 to vector<1x128xf32>
    %c0 = arith.constant 0 : index
    %c0_1 = arith.constant 0 : index
    %c0_2 = arith.constant 0 : index
    %2 = vector.load %arg3[%c0, %c0_1, %c0_2] : memref<1x72x32xbf16, #tpu.memory_space<vmem>>, vector<1x64x32xbf16>
    %3 = vector.shape_cast %2 : vector<1x64x32xbf16> to vector<64x32xbf16>
    %c0_3 = arith.constant 0 : index
    %c0_4 = arith.constant 0 : index
    %c0_5 = arith.constant 0 : index
    %4 = vector.load %arg4[%c0_3, %c0_4, %c0_5] : memref<2x32x128xbf16, #tpu.memory_space<vmem>>, vector<1x32x128xbf16>
    %5 = vector.shape_cast %4 : vector<1x32x128xbf16> to vector<32x128xbf16>
    %cst_6 = arith.constant dense<0.000000e+00> : vector<64x128xf32>
    %6 = tpu.matmul %3, %5, %cst_6 {dimension_numbers = #tpu.dot_dimension_numbers<[1], [0], [0], [1], [0, 0, 1, 1], [], []>} : vector<64x32xbf16>, vector<32x128xbf16>, vector<64x128xf32> -> vector<64x128xf32>
    %c0_7 = arith.constant 0 : index
    %c8 = arith.constant 8 : index
    %c0_8 = arith.constant 0 : index
    %7 = vector.load %arg3[%c0_7, %c8, %c0_8] : memref<1x72x32xbf16, #tpu.memory_space<vmem>>, vector<1x64x32xbf16>
    %8 = vector.shape_cast %7 : vector<1x64x32xbf16> to vector<64x32xbf16>
    %c1 = arith.constant 1 : index
    %c0_9 = arith.constant 0 : index
    %c0_10 = arith.constant 0 : index
    %9 = vector.load %arg4[%c1, %c0_9, %c0_10] : memref<2x32x128xbf16, #tpu.memory_space<vmem>>, vector<1x32x128xbf16>
    %10 = vector.shape_cast %9 : vector<1x32x128xbf16> to vector<32x128xbf16>
    %cst_11 = arith.constant dense<0.000000e+00> : vector<64x128xf32>
    %11 = tpu.matmul %8, %10, %cst_11 {dimension_numbers = #tpu.dot_dimension_numbers<[1], [0], [0], [1], [0, 0, 1, 1], [], []>} : vector<64x32xbf16>, vector<32x128xbf16>, vector<64x128xf32> -> vector<64x128xf32>
    %12 = arith.addf %6, %11 : vector<64x128xf32>
    %cst_12 = arith.constant dense<0.000000e+00> : vector<128xf32>
    %13 = vector.multi_reduction <add>, %12, %cst_12 [0] : vector<64x128xf32> to vector<128xf32>
    %14 = vector.shape_cast %13 : vector<128xf32> to vector<1x128xf32>
    %15 = arith.addf %0, %14 : vector<1x128xf32>
    %16 = arith.mulf %12, %12 : vector<64x128xf32>
    %cst_13 = arith.constant dense<0.000000e+00> : vector<128xf32>
    %17 = vector.multi_reduction <add>, %16, %cst_13 [0] : vector<64x128xf32> to vector<128xf32>
    %18 = vector.shape_cast %17 : vector<128xf32> to vector<1x128xf32>
    %19 = arith.addf %1, %18 : vector<1x128xf32>
    %c0_14 = arith.constant 0 : index
    %c0_15 = arith.constant 0 : index
    %20 = vector.load %arg8[%c0_14, %c0_15] : memref<64x128xf32, #tpu.memory_space<vmem>>, vector<64x128xf32>
    tpu.vector_store %arg8[%c0_14, %c0_15], %12 {strides = array<i32>} : memref<64x128xf32, #tpu.memory_space<vmem>>, vector<64x128xf32>,
    %cst_16 = arith.constant 1.562500e-02 : f32
    %21 = vector.broadcast %cst_16 : f32 to vector<1x128xf32>
    %22 = arith.mulf %15, %21 : vector<1x128xf32>
    %cst_17 = arith.constant 1.562500e-02 : f32
    %23 = vector.broadcast %cst_17 : f32 to vector<1x128xf32>
    %24 = arith.mulf %19, %23 : vector<1x128xf32>
    %25 = arith.mulf %22, %22 : vector<1x128xf32>
    %26 = arith.subf %24, %25 : vector<1x128xf32>
    %cst_18 = arith.constant 0.000000e+00 : f32
    %27 = vector.broadcast %cst_18 : f32 to vector<1x128xf32>
    %28 = arith.maximumf %26, %27 : vector<1x128xf32>
    %cst_19 = arith.constant 9.99999974E-6 : f32
    %29 = vector.broadcast %cst_19 : f32 to vector<1x128xf32>
    %30 = arith.addf %28, %29 : vector<1x128xf32>
    %31 = math.rsqrt %30 : vector<1x128xf32>
    %c0_20 = arith.constant 0 : index
    %c0_21 = arith.constant 0 : index
    %32 = vector.load %arg5[%c0_20, %c0_21] : memref<1x128xf32, #tpu.memory_space<vmem>>, vector<1x128xf32>
    %33 = arith.mulf %31, %32 : vector<1x128xf32>
    %c0_22 = arith.constant 0 : index
    %c0_23 = arith.constant 0 : index
    %34 = vector.load %arg6[%c0_22, %c0_23] : memref<1x128xf32, #tpu.memory_space<vmem>>, vector<1x128xf32>
    %35 = arith.mulf %22, %33 : vector<1x128xf32>
    %36 = arith.subf %34, %35 : vector<1x128xf32>
    %c0_24 = arith.constant 0 : index
    %c0_25 = arith.constant 0 : index
    %37 = vector.load %arg8[%c0_24, %c0_25] : memref<64x128xf32, #tpu.memory_space<vmem>>, vector<64x128xf32>
    %38 = vector.broadcast %33 : vector<1x128xf32> to vector<64x128xf32>
    %39 = arith.mulf %37, %38 : vector<64x128xf32>
    %40 = vector.broadcast %36 : vector<1x128xf32> to vector<64x128xf32>
    %41 = arith.addf %39, %40 : vector<64x128xf32>
    %cst_26 = arith.constant 0.000000e+00 : f32
    %42 = vector.broadcast %cst_26 : f32 to vector<64x128xf32>
    %43 = arith.maximumf %41, %42 : vector<64x128xf32>
    %44 = arith.truncf %43 : vector<64x128xf32> to vector<64x128xbf16>
    %c0_27 = arith.constant 0 : index
    %c0_28 = arith.constant 0 : index
    %c0_29 = arith.constant 0 : index
    %45 = vector.load %arg7[%c0_27, %c0_28, %c0_29] : memref<1x64x128xbf16, #tpu.memory_space<vmem>>, vector<1x64x128xbf16>
    %46 = vector.shape_cast %45 : vector<1x64x128xbf16> to vector<64x128xbf16>
    %47 = vector.shape_cast %44 : vector<64x128xbf16> to vector<1x64x128xbf16>
    tpu.vector_store %arg7[%c0_27, %c0_28, %c0_29], %47 {strides = array<i32>} : memref<1x64x128xbf16, #tpu.memory_space<vmem>>, vector<1x64x128xbf16>,
    return
  }
  func.func @transform_0(%arg0: i32, %arg1: i32, %arg2: memref<1xi32, #tpu.memory_space<smem>>) -> (i32, i32, i32) {
    %c0_i32 = arith.constant 0 : i32
    %c0_i32_0 = arith.constant 0 : i32
    %c0_i32_1 = arith.constant 0 : i32
    return %arg0, %c0_i32, %c0_i32_0 : i32, i32, i32
  }
  func.func @transform_1(%arg0: i32, %arg1: i32, %arg2: memref<1xi32, #tpu.memory_space<smem>>) -> (i32, i32, i32) {
    %c0_i32 = arith.constant 0 : i32
    %c0_i32_0 = arith.constant 0 : i32
    %c0_i32_1 = arith.constant 0 : i32
    return %c0_i32, %c0_i32_0, %arg1 : i32, i32, i32
  }
  func.func @transform_2(%arg0: i32, %arg1: i32, %arg2: memref<1xi32, #tpu.memory_space<smem>>) -> (i32, i32) {
    %c0_i32 = arith.constant 0 : i32
    %c0_i32_0 = arith.constant 0 : i32
    return %c0_i32, %arg1 : i32, i32
  }
  func.func @transform_3(%arg0: i32, %arg1: i32, %arg2: memref<1xi32, #tpu.memory_space<smem>>) -> (i32, i32) {
    %c0_i32 = arith.constant 0 : i32
    %c0_i32_0 = arith.constant 0 : i32
    return %c0_i32, %arg1 : i32, i32
  }
  func.func @transform_4(%arg0: i32, %arg1: i32, %arg2: memref<1xi32, #tpu.memory_space<smem>>) -> (i32, i32, i32) {
    %c0_i32 = arith.constant 0 : i32
    %c0_i32_0 = arith.constant 0 : i32
    return %arg0, %c0_i32, %arg1 : i32, i32, i32
  }
}

</mosaic_0001>

<llo_original>
// kernel: tpu_custom_call.1
$region0: #{tpu_custom_call.1}
  #allocation0 [shape = 'u32[]', space=smem, size = 0x4, offset = 0x4, fixed_abs, tag = 'smem constant byte address 0x4 - core index']
  #allocation1 [shape = 'u32[144,128]{1,0:T(1,128)}', space=vmem, size = 0x12000, scoped, tag = 'internal scratch']
  #allocation2 [shape = 'f32[64,128]{1,0:T(8,128)}', space=vmem, size = 0x8000, scoped, tag = 'scratch operand']
  #allocation3 [shape = 's32[1]{0}', space=sflag, size = 0x4, scoped, tag = 'scoped memory for tpu_custom_call.1']
  #allocation4 [shape = 's32[1]{0:T(128)S(6)}', space=smem, size = 0x200, scoped, tag = 'prefetched SMEM operand 0']
  %s0 = inlined_call_operand.<no memory space> [shape: s32[1], index: 0, kind: input, shape index: {}]
  %s1 = inlined_call_operand.vmem [shape: bf16[2,72,32], index: 1, kind: input, shape index: {}]
  %s2 = inlined_call_operand.vmem [shape: bf16[2,32,128], index: 2, kind: input, shape index: {}]
  %s3 = inlined_call_operand.vmem [shape: f32[1,128], index: 3, kind: input, shape index: {}]
  %s4 = inlined_call_operand.vmem [shape: f32[1,128], index: 4, kind: input, shape index: {}]
  %s5 = inlined_call_operand.hbm [shape: bf16[2,64,128], index: 5, kind: output, shape index: {}]
  %s6 = sld [smem:[#allocation0]]
  $region49: #{tpu_custom_call.1} parent=0
    _
  %s8 = ssub.s32 1, %s6
  %s9 = scalar_select 0, %s8, %s6
  %10 = sst [smem:[#allocation4]] %s0
  $region1: #{tpu_custom_call.1} parent=0
    #allocation5 [shape = 'u8[32768]{0}', space=vmem, size = 0x8000, scoped, tag = 'output window, operand 0']
    #allocation6 [shape = 's32[2]{0}', space=sflag, size = 0x8, scoped, tag = 'scoped memory for tpu_custom_call.1']
    %11 = vsyncpa [#allocation6], 0
    %s12 = scalar_lea.sflag [#allocation6], 1
    %13 = vsyncpa %s12, 0
    loop: start=0, step=1, limit=4
    $region2: #{tpu_custom_call.1} parent=1 // loop_pre_header
      _
    $region3: #{tpu_custom_call.1} parent=1 // loop_header
      %s15 = sphi 0, %s19
      %p16 = scmp.ge.s32.totalorder %s15, 4
      %s22 = sphi 0, %s34
      %s23 = sphi 0, %s30
      %s24 = sphi 0, %s22
      %s25 = sphi 0, %s23
      %s26 = sphi 0, %s24
      %s27 = sphi 0, %s25
      %s37 = sphi 0, %s39
      %s40 = sphi 0, %s37
      %s41 = sphi 0, %s40
      %s57 = sphi 0, %s41
      %s63 = sphi 0, %s65
      %s66 = sphi 0, %s63
      %s67 = sphi 0, %s66
      %s83 = sphi 0, %s67
      %s89 = sphi 0, %s91
      %s92 = sphi 0, %s89
      %s93 = sphi 0, %s92
      %s109 = sphi 0, %s93
      %s115 = sphi 0, %s117
      %s118 = sphi 0, %s115
      %s119 = sphi 0, %s118
      %s135 = sphi 0, %s119
      %s143 = sphi 0, %s145
      %s146 = sphi 0, %s143
      %s147 = sphi 0, %s146
      %s163 = sphi 0, %s147
    $region4: #{tpu_custom_call.1} parent=1 // loop_header_branch
      %18 = sbr.rel (%p16) target = $region8
    $region5: #{tpu_custom_call.1} parent=1 // loop_body
      %s20 = ssub.s32 %s15, 1
      %s21 = ssub.s32 %s15, 2
      %s28 = sadd.s32 1, %s23
      %p29 = scmp.ge.s32.totalorder %s28, 1
      %s30 = scalar_select %p29, 0, %s28
      %s31 = sadd.s32 1, %s22
      %s32 = scalar_select %p29, %s31, %s22
      %p33 = scmp.ge.s32.totalorder %s32, 2
      %s34 = scalar_select %p33, 0, %s32
      %s35 = ssub.s32 %s22, %s34
      %p36 = scmp.eq.s32.totalorder %s35, 0
      %s38 = sadd.s32 %s37, 1
      %s39 = scalar_select %p36, %s37, %s38
      %p42 = pneg %p36
      %p43 = scmp.eq.s32.totalorder %s15, 1
      %p44 = por %p42, %p43
      %p45 = scmp.ne.s32.totalorder %s37, %s40
      %p46 = scmp.eq.s32.totalorder %s15, 0
      %p47 = por %p45, %p46
      %p48 = scmp.ne.s32.totalorder %s37, %s40
      %p49 = scmp.eq.s32.totalorder %s20, 1
      %p50 = por %p48, %p49
      %p51 = scmp.ne.s32.totalorder %s40, %s41
      %p52 = scmp.eq.s32.totalorder %s20, 0
      %p53 = por %p51, %p52
      %p54 = scmp.ne.s32.totalorder %s40, %s41
      %p55 = scmp.eq.s32.totalorder %s21, 1
      %p56 = por %p54, %p55
      %p58 = scmp.ne.s32.totalorder %s41, %s57
      %p59 = scmp.eq.s32.totalorder %s21, 0
      %p60 = por %p58, %p59
      %s61 = ssub.s32 %s23, %s30
      %p62 = scmp.eq.s32.totalorder %s61, 0
      %s64 = sadd.s32 %s63, 1
      %s65 = scalar_select %p62, %s63, %s64
      %p68 = pneg %p62
      %p69 = scmp.eq.s32.totalorder %s15, 1
      %p70 = por %p68, %p69
      %p71 = scmp.ne.s32.totalorder %s63, %s66
      %p72 = scmp.eq.s32.totalorder %s15, 0
      %p73 = por %p71, %p72
      %p74 = scmp.ne.s32.totalorder %s63, %s66
      %p75 = scmp.eq.s32.totalorder %s20, 1
      %p76 = por %p74, %p75
      %p77 = scmp.ne.s32.totalorder %s66, %s67
      %p78 = scmp.eq.s32.totalorder %s20, 0
      %p79 = por %p77, %p78
      %p80 = scmp.ne.s32.totalorder %s66, %s67
      %p81 = scmp.eq.s32.totalorder %s21, 1
      %p82 = por %p80, %p81
      %p84 = scmp.ne.s32.totalorder %s67, %s83
      %p85 = scmp.eq.s32.totalorder %s21, 0
      %p86 = por %p84, %p85
      %s87 = ssub.s32 %s23, %s30
      %p88 = scmp.eq.s32.totalorder %s87, 0
      %s90 = sadd.s32 %s89, 1
      %s91 = scalar_select %p88, %s89, %s90
      %p94 = pneg %p88
      %p95 = scmp.eq.s32.totalorder %s15, 1
      %p96 = por %p94, %p95
      %p97 = scmp.ne.s32.totalorder %s89, %s92
      %p98 = scmp.eq.s32.totalorder %s15, 0
      %p99 = por %p97, %p98
      %p100 = scmp.ne.s32.totalorder %s89, %s92
      %p101 = scmp.eq.s32.totalorder %s20, 1
      %p102 = por %p100, %p101
      %p103 = scmp.ne.s32.totalorder %s92, %s93
      %p104 = scmp.eq.s32.totalorder %s20, 0
      %p105 = por %p103, %p104
      %p106 = scmp.ne.s32.totalorder %s92, %s93
      %p107 = scmp.eq.s32.totalorder %s21, 1
      %p108 = por %p106, %p107
      %p110 = scmp.ne.s32.totalorder %s93, %s109
      %p111 = scmp.eq.s32.totalorder %s21, 0
      %p112 = por %p110, %p111
      %s113 = ssub.s32 %s23, %s30
      %p114 = scmp.eq.s32.totalorder %s113, 0
      %s116 = sadd.s32 %s115, 1
      %s117 = scalar_select %p114, %s115, %s116
      %p120 = pneg %p114
      %p121 = scmp.eq.s32.totalorder %s15, 1
      %p122 = por %p120, %p121
      %p123 = scmp.ne.s32.totalorder %s115, %s118
      %p124 = scmp.eq.s32.totalorder %s15, 0
      %p125 = por %p123, %p124
      %p126 = scmp.ne.s32.totalorder %s115, %s118
      %p127 = scmp.eq.s32.totalorder %s20, 1
      %p128 = por %p126, %p127
      %p129 = scmp.ne.s32.totalorder %s118, %s119
      %p130 = scmp.eq.s32.totalorder %s20, 0
      %p131 = por %p129, %p130
      %p132 = scmp.ne.s32.totalorder %s118, %s119
      %p133 = scmp.eq.s32.totalorder %s21, 1
      %p134 = por %p132, %p133
      %p136 = scmp.ne.s32.totalorder %s119, %s135
      %p137 = scmp.eq.s32.totalorder %s21, 0
      %p138 = por %p136, %p137
      %s139 = ssub.s32 %s22, %s34
      %s140 = ssub.s32 %s23, %s30
      %s141 = sor.u32 %s139, %s140
      %p142 = scmp.eq.s32.totalorder %s141, 0
      %s144 = sadd.s32 %s143, 1
      %s145 = scalar_select %p142, %s143, %s144
      %p148 = pneg %p142
      %p149 = scmp.eq.s32.totalorder %s15, 1
      %p150 = por %p148, %p149
      %p151 = scmp.ne.s32.totalorder %s143, %s146
      %p152 = scmp.eq.s32.totalorder %s15, 0
      %p153 = por %p151, %p152
      %p154 = scmp.ne.s32.totalorder %s143, %s146
      %p155 = scmp.eq.s32.totalorder %s20, 1
      %p156 = por %p154, %p155
      %p157 = scmp.ne.s32.totalorder %s146, %s147
      %p158 = scmp.eq.s32.totalorder %s20, 0
      %p159 = por %p157, %p158
      %p160 = scmp.ne.s32.totalorder %s146, %s147
      %p161 = scmp.eq.s32.totalorder %s21, 1
      %p162 = por %p160, %p161
      %p164 = scmp.ne.s32.totalorder %s147, %s163
      %p165 = scmp.eq.s32.totalorder %s21, 0
      %p166 = por %p164, %p165
      %p167 = scmp.le.s32.totalorder 1, %s15
      %p168 = scmp.lt.s32.totalorder %s15, 3
      %p169 = pnand %p167, %p168
      %p170 = pneg %p169
      // Predicated region
      $region9: #{tpu_custom_call.1} parent=5 // pred_check
        _
      $region10: #{tpu_custom_call.1} parent=5 // pred_check_branch
        %172 = sbr.rel (%p169) target = $region12
      $region11: #{tpu_custom_call.1} parent=5 // pred_region
        %s173 = ssub.s32 %s15, 1
        // Predicated region
        $region13: #{tpu_custom_call.1} parent=11 // pred_check
          %p174 = pneg %p79
        $region14: #{tpu_custom_call.1} parent=11 // pred_check_branch
          %176 = sbr.rel (%p174) target = $region16
        $region15: #{tpu_custom_call.1} parent=11 // pred_region
          %p177 = scmp.lt.s32.totalorder %s25, 0
          %s178 = scalar_select %p177, %s25, 0
          %s179 = smul.addr %s178, 4
          %s180 = scalar_lea.vmem %s2, %s179
        $region16: #{tpu_custom_call.1} parent=11 // pred_fallthru
          _
        // Predicated region
        $region17: #{tpu_custom_call.1} parent=11 // pred_check
          %p181 = pneg %p105
        $region18: #{tpu_custom_call.1} parent=11 // pred_check_branch
          %183 = sbr.rel (%p181) target = $region20
        $region19: #{tpu_custom_call.1} parent=11 // pred_region
          %p184 = scmp.lt.s32.totalorder %s25, 0
          %s185 = scalar_select %p184, %s25, 0
          %s186 = scalar_lea.vmem %s3, %s185
        $region20: #{tpu_custom_call.1} parent=11 // pred_fallthru
          _
        // Predicated region
        $region21: #{tpu_custom_call.1} parent=11 // pred_check
          %p187 = pneg %p131
        $region22: #{tpu_custom_call.1} parent=11 // pred_check_branch
          %189 = sbr.rel (%p187) target = $region24
        $region23: #{tpu_custom_call.1} parent=11 // pred_region
          %p190 = scmp.lt.s32.totalorder %s25, 0
          %s191 = scalar_select %p190, %s25, 0
          %s192 = scalar_lea.vmem %s4, %s191
        $region24: #{tpu_custom_call.1} parent=11 // pred_fallthru
          _
      $region12: #{tpu_custom_call.1} parent=5 // pred_fallthru
        _
      %p193 = scmp.lt.s32.totalorder %s15, 2
      // Predicated region
      $region25: #{tpu_custom_call.1} parent=5 // pred_check
        %p194 = pneg %p193
      $region26: #{tpu_custom_call.1} parent=5 // pred_check_branch
        %196 = sbr.rel (%p194) target = $region28
      $region27: #{tpu_custom_call.1} parent=5 // pred_region
        // Predicated region
        $region29: #{tpu_custom_call.1} parent=27 // pred_check
          %p197 = pneg %p47
        $region30: #{tpu_custom_call.1} parent=27 // pred_check_branch
          %199 = sbr.rel (%p197) target = $region32
        $region31: #{tpu_custom_call.1} parent=27 // pred_region
          %p200 = scmp.lt.s32.totalorder %s22, 1
          %s201 = scalar_select %p200, %s22, 1
          %s202 = smul.addr %s201, 9
          %s203 = smul.addr %s202, 4
          %s204 = scalar_lea.vmem %s1, %s203
        $region32: #{tpu_custom_call.1} parent=27 // pred_fallthru
          _
      $region28: #{tpu_custom_call.1} parent=5 // pred_fallthru
        _
      %p205 = scmp.le.s32.totalorder 1, %s15
      %p206 = scmp.lt.s32.totalorder %s15, 3
      %p207 = pnand %p205, %p206
      %p208 = pneg %p207
      // Predicated region
      $region33: #{tpu_custom_call.1} parent=5 // pred_check
        _
      $region34: #{tpu_custom_call.1} parent=5 // pred_check_branch
        %210 = sbr.rel (%p207) target = $region36
      $region35: #{tpu_custom_call.1} parent=5 // pred_region
        %s211 = ssub.s32 %s15, 1
        %p212 = scmp.lt.s32.totalorder %s24, 1
        %s213 = scalar_select %p212, %s24, 1
        %s214 = smul.addr %s213, 9
        %s215 = smul.addr %s214, 4
        %s216 = scalar_lea.vmem %s1, %s215
        %p217 = pneg %p53
        %p218 = pneg %p50
        %p219 = scmp.lt.s32.totalorder %s25, 0
        %s220 = scalar_select %p219, %s25, 0
        %s221 = smul.addr %s220, 4
        %s222 = scalar_lea.vmem %s2, %s221
        %p223 = pneg %p79
        %p224 = pneg %p76
        %p225 = scmp.lt.s32.totalorder %s25, 0
        %s226 = scalar_select %p225, %s25, 0
        %s227 = scalar_lea.vmem %s3, %s226
        %p228 = pneg %p105
        %p229 = pneg %p102
        %p230 = scmp.lt.s32.totalorder %s25, 0
        %s231 = scalar_select %p230, %s25, 0
        %s232 = scalar_lea.vmem %s4, %s231
        %p233 = pneg %p131
        %p234 = pneg %p128
        %p235 = pneg %p159
        %p236 = pneg %p156
        %s237 = sand.u32 %s146, 1
        %s238 = scalar_lea.sflag [#allocation6], %s237
        %s239 = sand.u32 %s146, 1
        %s240 = smul.addr %s239, 32
        %s241 = scalar_lea.vmem [#allocation5], %s240
        %p242 = scmp.lt.s32.totalorder %s24, 1
        %s243 = scalar_select %p242, %s24, 1
        %s244 = smul.addr %s243, 9
        %s245 = smul.addr %s244, 4
        %s246 = scalar_lea.vmem %s1, %s245
        %p247 = scmp.lt.s32.totalorder %s25, 0
        %s248 = scalar_select %p247, %s25, 0
        %s249 = smul.addr %s248, 4
        %s250 = scalar_lea.vmem %s2, %s249
        %p251 = scmp.lt.s32.totalorder %s25, 0
        %s252 = scalar_select %p251, %s25, 0
        %s253 = scalar_lea.vmem %s3, %s252
        %p254 = scmp.lt.s32.totalorder %s25, 0
        %s255 = scalar_select %p254, %s25, 0
        %s256 = scalar_lea.vmem %s4, %s255
        %v258 = vld [vmem:[%s246] sm:$0xf]
        %v259 = vld [vmem:[%s246 + $0x4] sm:$0xf]
        %v260 = vld [vmem:[%s246 + $0x8] sm:$0xf]
        %v261 = vld [vmem:[%s246 + $0xc] sm:$0xf]
        %v262 = vld [vmem:[%s246 + $0x10] sm:$0xf]
        %v263 = vld [vmem:[%s246 + $0x14] sm:$0xf]
        %v264 = vld [vmem:[%s246 + $0x18] sm:$0xf]
        %v265 = vld [vmem:[%s246 + $0x1c] sm:$0xf]
        %v266 = vld [vmem:[%s250] sm:$0xf]
        %v267 = vld [vmem:[%s250 + $0x4] sm:$0xf]
        %v268 = vld [vmem:[%s250 + $0x8] sm:$0xf]
        %v269 = vld [vmem:[%s250 + $0xc] sm:$0xf]
        %v270 = vld [vmem:[%s246 + $0x20] sm:$0xf]
        %s271 = scalar_lea.vmem %s250, 16
        %v272 = vld [vmem:[%s271] sm:$0xf]
        %v273 = vld [vmem:[%s271 + $0x4] sm:$0xf]
        %v274 = vld [vmem:[%s271 + $0x8] sm:$0xf]
        %v275 = vld [vmem:[%s271 + $0xc] sm:$0xf]
        %v284 = vunpack.c.l.b16 %v259
        %v285 = vunpack.c.l.b16 %v260
        %v286 = vunpack.c.l.b16 %v261
        %v287 = vunpack.c.l.b16 %v262
        %v288 = vunpack.c.l.b16 %v263
        %v289 = vunpack.c.l.b16 %v264
        %v290 = vunpack.c.l.b16 %v265
        %v291 = vunpack.c.l.b16 %v270
        %v292 = vpack.c.b16 %v285, %v284
        %v293 = vpack.c.b16 %v287, %v286
        %v294 = vpack.c.b16 %v289, %v288
        %v295 = vpack.c.b16 %v291, %v290
        %v300 = vunpack.c.l.b16 %v272
        %v301 = vunpack.c.l.b16 %v273
        %v302 = vunpack.c.l.b16 %v274
        %v303 = vunpack.c.l.b16 %v275
        %v304 = vpack.c.b16 %v301, %v300
        %v305 = vpack.c.b16 %v303, %v302
        %vm308 = vcmask 261120
        %v310 = vsel %vm308, %v292, 0
        %v313 = vsel %vm308, %v293, 0
        %v316 = vsel %vm308, %v294, 0
        %v319 = vsel %vm308, %v295, 0
        %321 = vmatprep.subr.bf16.mxu0 0
        %322 = vmatpush1.bf16.msra.mxu0 %v304
        %323 = vmatprep.subr.bf16.mxu0 0
        %324 = vmatpush1.bf16.msra.mxu0 %v305
        %325 = vmatprep.subr.bf16.mxu0 0
        %326 = vmatpush1.bf16.msra.mxu0 0
        %327 = vmatprep.subr.bf16.mxu0 0
        %328 = vmatpush1.bf16.msra.mxu0 0
        %329 = vmatprep.subr.bf16.mxu0 0
        %330 = vmatpush1.bf16.msra.mxu0 0
        %331 = vmatprep.subr.bf16.mxu0 0
        %332 = vmatpush1.bf16.msra.mxu0 0
        %333 = vmatprep.subr.bf16.mxu0 0
        %334 = vmatpush1.bf16.msra.mxu0 0
        %335 = vmatprep.subr.bf16.mxu0 0
        %336 = vmatpush1.bf16.msra.mxu0 0
        %337 = vmatprep.subr.bf16.mxu0 0
        %338 = vmatpush1.bf16.msra.mxu0 0
        %339 = vmatprep.subr.bf16.mxu0 0
        %340 = vmatpush1.bf16.msra.mxu0 0
        %341 = vmatprep.subr.bf16.mxu0 0
        %342 = vmatpush1.bf16.msra.mxu0 0
        %343 = vmatprep.subr.bf16.mxu0 0
        %344 = vmatpush1.bf16.msra.mxu0 0
        %345 = vmatprep.subr.bf16.mxu0 0
        %346 = vmatpush1.bf16.msra.mxu0 0
        %347 = vmatprep.subr.bf16.mxu0 0
        %348 = vmatpush1.bf16.msra.mxu0 0
        %349 = vmatprep.subr.bf16.mxu0 0
        %350 = vmatpush1.bf16.msra.mxu0 0
        %351 = vmatprep.subr.bf16.mxu0 0
        %352 = vmatpush1.bf16.msra.mxu0 0
        %353 = vmatprep.mubr.bf16.mxu0 0
        %354 = vmatmul.mubr.bf16.gmra.mrb[0].mxu0 %v310
        %v355 = vpop.f32.mrb[0].mxu0
        %v356 = vadd.f32 0.0, %v355
        %v357 = vpop.f32.mrb[0].mxu0
        %v358 = vpop.f32.mrb[0].mxu0
        %v359 = vadd.f32 0.0, %v358
        %v360 = vpop.f32.mrb[0].mxu0
        %361 = vmatprep.mubr.bf16.mxu0 0
        %362 = vmatmul.mubr.bf16.gmra.mrb[0].mxu0 %v313
        %v363 = vpop.f32.mrb[0].mxu0
        %v364 = vadd.f32 0.0, %v363
        %v365 = vpop.f32.mrb[0].mxu0
        %v366 = vpop.f32.mrb[0].mxu0
        %v367 = vadd.f32 0.0, %v366
        %v368 = vpop.f32.mrb[0].mxu0
        %369 = vmatprep.mubr.bf16.mxu0 0
        %370 = vmatmul.mubr.bf16.gmra.mrb[0].mxu0 %v316
        %v371 = vpop.f32.mrb[0].mxu0
        %v372 = vadd.f32 0.0, %v371
        %v373 = vpop.f32.mrb[0].mxu0
        %v374 = vpop.f32.mrb[0].mxu0
        %v375 = vadd.f32 0.0, %v374
        %v376 = vpop.f32.mrb[0].mxu0
        %377 = vmatprep.mubr.bf16.mxu0 0
        %378 = vmatmul.mubr.bf16.gmra.mrb[0].mxu0 %v319
        %v379 = vpop.f32.mrb[0].mxu0
        %v380 = vadd.f32 0.0, %v379
        %v381 = vpop.f32.mrb[0].mxu0
        %v382 = vpop.f32.mrb[0].mxu0
        %v383 = vadd.f32 0.0, %v382
        %v384 = vpop.f32.mrb[0].mxu0
        %385 = vdwg.mxu0
        %v387 = vunpack.c.l.b16 %v258
        %v388 = vpack.c.b16 %v284, %v387
        %v389 = vpack.c.b16 %v286, %v285
        %v390 = vpack.c.b16 %v288, %v287
        %v391 = vpack.c.b16 %v290, %v289
        %v396 = vunpack.c.l.b16 %v266
        %v397 = vunpack.c.l.b16 %v267
        %v398 = vunpack.c.l.b16 %v268
        %v399 = vunpack.c.l.b16 %v269
        %v400 = vpack.c.b16 %v397, %v396
        %v401 = vpack.c.b16 %v399, %v398
        %v405 = vsel %vm308, %v388, 0
        %v408 = vsel %vm308, %v389, 0
        %v411 = vsel %vm308, %v390, 0
        %v414 = vsel %vm308, %v391, 0
        %416 = vmatprep.subr.bf16.mxu0 0
        %417 = vmatpush1.bf16.msra.mxu0 %v400
        %418 = vmatprep.subr.bf16.mxu0 0
        %419 = vmatpush1.bf16.msra.mxu0 %v401
        %420 = vmatprep.subr.bf16.mxu0 0
        %421 = vmatpush1.bf16.msra.mxu0 0
        %422 = vmatprep.subr.bf16.mxu0 0
        %423 = vmatpush1.bf16.msra.mxu0 0
        %424 = vmatprep.subr.bf16.mxu0 0
        %425 = vmatpush1.bf16.msra.mxu0 0
        %426 = vmatprep.subr.bf16.mxu0 0
        %427 = vmatpush1.bf16.msra.mxu0 0
        %428 = vmatprep.subr.bf16.mxu0 0
        %429 = vmatpush1.bf16.msra.mxu0 0
        %430 = vmatprep.subr.bf16.mxu0 0
        %431 = vmatpush1.bf16.msra.mxu0 0
        %432 = vmatprep.subr.bf16.mxu0 0
        %433 = vmatpush1.bf16.msra.mxu0 0
        %434 = vmatprep.subr.bf16.mxu0 0
        %435 = vmatpush1.bf16.msra.mxu0 0
        %436 = vmatprep.subr.bf16.mxu0 0
        %437 = vmatpush1.bf16.msra.mxu0 0
        %438 = vmatprep.subr.bf16.mxu0 0
        %439 = vmatpush1.bf16.msra.mxu0 0
        %440 = vmatprep.subr.bf16.mxu0 0
        %441 = vmatpush1.bf16.msra.mxu0 0
        %442 = vmatprep.subr.bf16.mxu0 0
        %443 = vmatpush1.bf16.msra.mxu0 0
        %444 = vmatprep.subr.bf16.mxu0 0
        %445 = vmatpush1.bf16.msra.mxu0 0
        %446 = vmatprep.subr.bf16.mxu0 0
        %447 = vmatpush1.bf16.msra.mxu0 0
        %448 = vmatprep.mubr.bf16.mxu0 0
        %449 = vmatmul.mubr.bf16.gmra.mrb[0].mxu0 %v405
        %v450 = vpop.f32.mrb[0].mxu0
        %v451 = vadd.f32 %v356, %v450
        %v452 = vpop.f32.mrb[0].mxu0
        %v453 = vpop.f32.mrb[0].mxu0
        %v454 = vadd.f32 %v359, %v453
        %v455 = vpop.f32.mrb[0].mxu0
        %456 = vmatprep.mubr.bf16.mxu0 0
        %457 = vmatmul.mubr.bf16.gmra.mrb[0].mxu0 %v408
        %v458 = vpop.f32.mrb[0].mxu0
        %v459 = vadd.f32 %v364, %v458
        %v460 = vpop.f32.mrb[0].mxu0
        %v461 = vpop.f32.mrb[0].mxu0
        %v462 = vadd.f32 %v367, %v461
        %v463 = vpop.f32.mrb[0].mxu0
        %464 = vmatprep.mubr.bf16.mxu0 0
        %465 = vmatmul.mubr.bf16.gmra.mrb[0].mxu0 %v411
        %v466 = vpop.f32.mrb[0].mxu0
        %v467 = vadd.f32 %v372, %v466
        %v468 = vpop.f32.mrb[0].mxu0
        %v469 = vpop.f32.mrb[0].mxu0
        %v470 = vadd.f32 %v375, %v469
        %v471 = vpop.f32.mrb[0].mxu0
        %472 = vmatprep.mubr.bf16.mxu0 0
        %473 = vmatmul.mubr.bf16.gmra.mrb[0].mxu0 %v414
        %v474 = vpop.f32.mrb[0].mxu0
        %v475 = vadd.f32 %v380, %v474
        %v476 = vpop.f32.mrb[0].mxu0
        %v477 = vpop.f32.mrb[0].mxu0
        %v478 = vadd.f32 %v383, %v477
        %v479 = vpop.f32.mrb[0].mxu0
        %480 = vdwg.mxu0
        %v481 = vadd.f32 %v451, %v454
        %v482 = vadd.f32 %v481, %v459
        %v483 = vadd.f32 %v482, %v462
        %v484 = vadd.f32 %v483, %v467
        %v485 = vadd.f32 %v484, %v470
        %v486 = vadd.f32 %v485, %v475
        %v487 = vadd.f32 %v486, %v478
        %v488 = vrot.slane %v487, 4
        %v489 = vadd.f32 %v487, %v488
        %v490 = vrot.slane %v489, 2
        %v491 = vadd.f32 %v489, %v490
        %v492 = vrot.slane %v491, 1
        %v493 = vadd.f32 %v491, %v492
        %v494 = vadd.f32 %v493, 0.0
        %v495 = vmul.f32 %v451, %v451
        %v496 = vmul.f32 %v454, %v454
        %v497 = vmul.f32 %v459, %v459
        %v498 = vmul.f32 %v462, %v462
        %v499 = vmul.f32 %v467, %v467
        %v500 = vmul.f32 %v470, %v470
        %v501 = vmul.f32 %v475, %v475
        %v502 = vmul.f32 %v478, %v478
        %v503 = vadd.f32 %v495, %v496
        %v504 = vadd.f32 %v503, %v497
        %v505 = vadd.f32 %v504, %v498
        %v506 = vadd.f32 %v505, %v499
        %v507 = vadd.f32 %v506, %v500
        %v508 = vadd.f32 %v507, %v501
        %v509 = vadd.f32 %v508, %v502
        %v510 = vrot.slane %v509, 4
        %v511 = vadd.f32 %v509, %v510
        %v512 = vrot.slane %v511, 2
        %v513 = vadd.f32 %v511, %v512
        %v514 = vrot.slane %v513, 1
        %v515 = vadd.f32 %v513, %v514
        %v516 = vadd.f32 %v515, 0.0
        %517 = vst [vmem:[#allocation2] sm:$0xff] %v451
        %518 = vst [vmem:[#allocation2 + $0x8] sm:$0xff] %v454
        %519 = vst [vmem:[#allocation2 + $0x10] sm:$0xff] %v459
        %520 = vst [vmem:[#allocation2 + $0x18] sm:$0xff] %v462
        %521 = vst [vmem:[#allocation2 + $0x20] sm:$0xff] %v467
        %522 = vst [vmem:[#allocation2 + $0x28] sm:$0xff] %v470
        %523 = vst [vmem:[#allocation2 + $0x30] sm:$0xff] %v475
        %524 = vst [vmem:[#allocation2 + $0x38] sm:$0xff] %v478
        %v525 = vmul.f32 %v494, 0.015625
        %v526 = vmul.f32 %v516, 0.015625
        %v527 = vmul.f32 %v525, %v525
        %v528 = vsub.f32 %v526, %v527
        %v529 = vmax.f32 %v528, 0.0
        %v530 = vadd.f32 %v529, 1e-05
        %v531 = vrsqrt.pop %v530
        %v532 = vld [vmem:[%s253] sm:$0x1]
        %v533 = vmul.f32 %v531, %v532
        %v534 = vld [vmem:[%s256] sm:$0x1]
        %v535 = vmul.f32 %v525, %v533
        %v536 = vsub.f32 %v534, %v535
        %v537 = vld [vmem:[#allocation2] sm:$0xff]
        %v538 = vld [vmem:[#allocation2 + $0x8] sm:$0xff]
        %v539 = vld [vmem:[#allocation2 + $0x10] sm:$0xff]
        %v540 = vld [vmem:[#allocation2 + $0x18] sm:$0xff]
        %v541 = vld [vmem:[#allocation2 + $0x20] sm:$0xff]
        %v542 = vld [vmem:[#allocation2 + $0x28] sm:$0xff]
        %v543 = vld [vmem:[#allocation2 + $0x30] sm:$0xff]
        %v544 = vld [vmem:[#allocation2 + $0x38] sm:$0xff]
        %v545 = vlaneseq
        %v546 = vshrl.u32 %v545, 7
        %v547 = vsub.s32 0, %v546
        %v548 = vrot.slane %v533, %v547
        %v549 = vmul.f32 %v537, %v548
        %v550 = vmul.f32 %v538, %v548
        %v551 = vmul.f32 %v539, %v548
        %v552 = vmul.f32 %v540, %v548
        %v553 = vmul.f32 %v541, %v548
        %v554 = vmul.f32 %v542, %v548
        %v555 = vmul.f32 %v543, %v548
        %v556 = vmul.f32 %v544, %v548
        %v558 = vlaneseq
        %v559 = vshrl.u32 %v558, 7
        %v560 = vsub.s32 0, %v559
        %v561 = vrot.slane %v536, %v560
        %v563 = vadd.f32 %v549, %v561
        %v564 = vadd.f32 %v550, %v561
        %v565 = vadd.f32 %v551, %v561
        %v566 = vadd.f32 %v552, %v561
        %v567 = vadd.f32 %v553, %v561
        %v568 = vadd.f32 %v554, %v561
        %v569 = vadd.f32 %v555, %v561
        %v570 = vadd.f32 %v556, %v561
        %v571 = vmax.f32 %v563, 0.0
        %v572 = vmax.f32 %v564, 0.0
        %v573 = vmax.f32 %v565, 0.0
        %v574 = vmax.f32 %v566, 0.0
        %v575 = vmax.f32 %v567, 0.0
        %v576 = vmax.f32 %v568, 0.0
        %v577 = vmax.f32 %v569, 0.0
        %v578 = vmax.f32 %v570, 0.0
        %v579 = vpack.c.bf16 %v572, %v571
        %v580 = vpack.c.bf16 %v574, %v573
        %v581 = vpack.c.bf16 %v576, %v575
        %v582 = vpack.c.bf16 %v578, %v577
        %v587 = vunpack.c.l.b16 %v579
        %v588 = vunpack.c.h.b16 %v579
        %v589 = vunpack.c.l.b16 %v580
        %v590 = vunpack.c.h.b16 %v580
        %v591 = vunpack.c.l.b16 %v581
        %v592 = vunpack.c.h.b16 %v581
        %v593 = vunpack.c.l.b16 %v582
        %v594 = vunpack.c.h.b16 %v582
        %v595 = vpack.c.b16 %v587, %v587
        %v596 = vpack.c.b16 %v588, %v588
        %v597 = vpack.c.b16 %v589, %v589
        %v598 = vpack.c.b16 %v590, %v590
        %v599 = vpack.c.b16 %v591, %v591
        %v600 = vpack.c.b16 %v592, %v592
        %v601 = vpack.c.b16 %v593, %v593
        %v602 = vpack.c.b16 %v594, %v594
        %611 = vst [vmem:[%s241] sm:$0xf] %v595
        %612 = vst [vmem:[%s241 + $0x4] sm:$0xf] %v596
        %613 = vst [vmem:[%s241 + $0x8] sm:$0xf] %v597
        %614 = vst [vmem:[%s241 + $0xc] sm:$0xf] %v598
        %615 = vst [vmem:[%s241 + $0x10] sm:$0xf] %v599
        %616 = vst [vmem:[%s241 + $0x14] sm:$0xf] %v600
        %617 = vst [vmem:[%s241 + $0x18] sm:$0xf] %v601
        %618 = vst [vmem:[%s241 + $0x1c] sm:$0xf] %v602
        %s619 = sand.u32 %s146, 1
        %s620 = scalar_lea.sflag [#allocation6], %s619
        %s621 = sand.u32 %s146, 1
        %s622 = smul.addr %s621, 32
        %s623 = scalar_lea.vmem [#allocation5], %s622
        // Predicated region
        $region37: #{tpu_custom_call.1} parent=35 // pred_check
          %p624 = pneg %p156
        $region38: #{tpu_custom_call.1} parent=35 // pred_check_branch
          %626 = sbr.rel (%p624) target = $region40
        $region39: #{tpu_custom_call.1} parent=35 // pred_region
          %s628 = ssub.s32 512, 512
          %629 = vsyncadd %s620, %s628
          %s630 = smul.addr %s24, 8
          %s631 = sadd.s32 %s25, %s630
          %s632 = smul.addr %s631, 64
          %s633 = scalar_lea.hbm %s5, %s632
          %s634 = sshll.u32 %s623, 4
          %s635 = int_to_ptr.vmem [resolvable:$true] %s634
          %640 = dma.vmem_to_hbm [thread:$0]  %s635, 512, %s633, %s620, 64, 64, 4
        $region40: #{tpu_custom_call.1} parent=35 // pred_fallthru
          _
      $region36: #{tpu_custom_call.1} parent=5 // pred_fallthru
        _
      %p641 = scmp.le.s32.totalorder 2, %s15
      // Predicated region
      $region41: #{tpu_custom_call.1} parent=5 // pred_check
        %p642 = pneg %p641
      $region42: #{tpu_custom_call.1} parent=5 // pred_check_branch
        %644 = sbr.rel (%p642) target = $region44
      $region43: #{tpu_custom_call.1} parent=5 // pred_region
        %s645 = ssub.s32 %s15, 2
        // Predicated region
        $region45: #{tpu_custom_call.1} parent=43 // pred_check
          %p646 = pneg %p162
        $region46: #{tpu_custom_call.1} parent=43 // pred_check_branch
          %648 = sbr.rel (%p646) target = $region48
        $region47: #{tpu_custom_call.1} parent=43 // pred_region
          %s649 = sand.u32 %s147, 1
          %s650 = scalar_lea.sflag [#allocation6], %s649
          %s651 = sand.u32 %s147, 1
          %s652 = smul.addr %s651, 32
          %s653 = scalar_lea.vmem [#allocation5], %s652
          %654 = dma.done %s650, 512
        $region48: #{tpu_custom_call.1} parent=43 // pred_fallthru
          _
      $region44: #{tpu_custom_call.1} parent=5 // pred_fallthru
        _
    $region6: #{tpu_custom_call.1} parent=1 // loop_footer
      %s19 = sadd.s32 1, %s15
    $region7: #{tpu_custom_call.1} parent=1 // loop_footer_branch
      %14 = sbr.rel target = $region3
    $region8: #{tpu_custom_call.1} parent=1 // loop_exit
      _
    %655 = vsyncpa [#allocation6], 1
    %s656 = scalar_lea.sflag [#allocation6], 1
    %657 = vsyncpa %s656, 1

</llo_original>
